<compile_context>
chip_gen: v7x
topology: tpu7x:2x2x1
jax: 0.10.0
libtpu: 0.0.40
codegen_flags: <defaults>
</compile_context>

<pallas_src>
import functools

import jax
import jax.numpy as jnp
from jax.experimental import pallas as pl
from jax.experimental.pallas import tpu as pltpu


def layernorm_kernel(x_ref, w_ref, b_ref, o_ref, *, eps):
    # x_ref: (ROW_TILE, d_model) tile; w_ref/b_ref: (1, d_model), resident.
    x = x_ref[...].astype(jnp.float32)
    d_model = x.shape[-1]
    inv_d = jnp.float32(1.0 / d_model)

    mean = jnp.sum(x, axis=-1, keepdims=True) * inv_d
    xc = x - mean
    var = jnp.sum(xc * xc, axis=-1, keepdims=True) * inv_d  # unbiased=False
    inv = jax.lax.rsqrt(var + jnp.float32(eps))

    y = xc * inv * w_ref[...].astype(jnp.float32) + b_ref[...].astype(jnp.float32)
    o_ref[...] = y.astype(o_ref.dtype)


def _round_up(x, m):
    return (x + m - 1) // m * m


def _target_tile_bytes():
    # Bigger tiles on v6e/v7x (high HBM BW -> per-grid-step overhead matters
    # more); 4 MiB elsewhere (v5e: step overhead already <4%, bigger buys
    # nothing).
    try:
        kind = jax.devices()[0].device_kind.lower()
    except Exception:
        kind = ""
    if "v6" in kind or "v7" in kind:
        return 8 << 20
    return 4 << 20


def _vmem_capacity_bytes():
    try:
        return int(pltpu.get_tpu_info().vmem_capacity_bytes)
    except Exception:
        return 128 << 20


def layernorm(x, w, b, *, eps=1e-5, row_tile=None):
    """x: [batch, posn, d_model]; w, b: [d_model]."""
    batch, posn, d_model = x.shape
    rows = batch * posn

    x2 = x.reshape(rows, d_model)
    w2 = w.reshape(1, d_model)
    b2 = b.reshape(1, d_model)

    itemsize = int(jnp.dtype(x.dtype).itemsize)
    sublane = max(8, 32 // max(1, itemsize))       # 8 f32 / 16 bf16 / 32 int8
    lanes = _round_up(d_model, 128)                # physical lane width (sizing only)

    if row_tile is None:
        rt = _target_tile_bytes() // (lanes * itemsize)
        rt = max(sublane, (rt // sublane) * sublane)
        # Keep the grid at least ~4 steps so both v7x TensorCores get work.
        min_steps = 4
        rt = min(rt, max(sublane, _round_up(pl.cdiv(rows, min_steps), sublane)))
        row_tile = rt
    row_tile = max(sublane, (row_tile // sublane) * sublane)
    row_tile = min(row_tile, _round_up(rows, sublane))

    grid_steps = pl.cdiv(rows, row_tile)  # ragged last block handled by Pallas

    # VMEM: double-buffered in + out tiles, f32 intermediates (upcast + centered
    # x), resident w/b, plus margin; capped at 0.75x physical VMEM (48 MiB v7x).
    io_tile = row_tile * lanes * itemsize
    f32_tile = row_tile * lanes * 4
    vmem_needed = 4 * io_tile + 2 * f32_tile + 4 * lanes * 4 + (2 << 20)
    vmem_cap = int(0.75 * _vmem_capacity_bytes())
    vmem_bytes = int(min(vmem_cap, max(32 << 20, vmem_needed)))

    kernel = functools.partial(layernorm_kernel, eps=eps)

    out = pl.pallas_call(
        kernel,
        out_shape=jax.ShapeDtypeStruct((rows, d_model), x.dtype),
        grid_spec=pltpu.PrefetchScalarGridSpec(
            num_scalar_prefetch=0,
            grid=(grid_steps,),
            in_specs=[
                pl.BlockSpec((row_tile, d_model), lambda i: (i, 0)),
                pl.BlockSpec((1, d_model), lambda i: (0, 0)),  # w: resident
                pl.BlockSpec((1, d_model), lambda i: (0, 0)),  # b: resident
            ],
            out_specs=pl.BlockSpec((row_tile, d_model), lambda i: (i, 0)),
        ),
        compiler_params=pltpu.CompilerParams(
            dimension_semantics=("parallel",),
            vmem_limit_bytes=vmem_bytes,
        ),
    )(x2, w2, b2)

    return out.reshape(batch, posn, d_model)


def _reference(x, w, b, eps):
    mean = jnp.mean(x, axis=-1, keepdims=True)
    var = jnp.mean((x - mean) ** 2, axis=-1, keepdims=True)  # unbiased=False
    return (x - mean) / jnp.sqrt(var + eps) * w + b


if __name__ == "__main__":
    eps = 1e-5
    key = jax.random.PRNGKey(0)

    ok = True

    # Case 1: module-consistent shape (d_model = 768, lane-aligned).
    k1, k2 = jax.random.split(key)
    batch, posn, d_model = 2, 8, 768
    x = jax.random.normal(k1, (batch, posn, d_model), dtype=jnp.float32)
    w = jnp.ones((d_model,), dtype=jnp.float32)   # LayerNorm.__init__: ones
    b = jnp.zeros((d_model,), dtype=jnp.float32)  # LayerNorm.__init__: zeros

    out = jax.block_until_ready(layernorm(x, w, b, eps=eps))
    ref = _reference(x, w, b, eps)
    ok &= bool(out.shape == x.shape and out.dtype == x.dtype)
    ok &= bool(jnp.allclose(out, ref, atol=1e-5, rtol=1e-4))

    # Case 2: non-aligned d_model and odd row count (exercises the ragged
    # last-row block and the non-128 feature block), with non-trivial w/b.
    batch2, posn2, d_model2 = 3, 7, 100
    x2 = jax.random.normal(k2, (batch2, posn2, d_model2), dtype=jnp.float32)
    w2 = 1.0 + 0.1 * jnp.arange(d_model2, dtype=jnp.float32)
    b2 = 0.01 * jnp.arange(d_model2, dtype=jnp.float32)

    out2 = jax.block_until_ready(layernorm(x2, w2, b2, eps=eps))
    ref2 = _reference(x2, w2, b2, eps)
    ok &= bool(out2.shape == x2.shape and out2.dtype == x2.dtype)
    ok &= bool(jnp.allclose(out2, ref2, atol=1e-5, rtol=1e-4))

    assert ok, "mismatch vs reference"
    print("KERNEL_OK")
</pallas_src>

<mosaic_0001>
module attributes {stable_mosaic.version = 11 : i64} {
  func.func @layernorm_kernel(%arg0: i32, %arg1: memref<8x768xf32, #tpu.memory_space<vmem>>, %arg2: memref<1x768xf32, #tpu.memory_space<vmem>>, %arg3: memref<1x768xf32, #tpu.memory_space<vmem>>, %arg4: memref<8x768xf32, #tpu.memory_space<vmem>>) attributes {dimension_semantics = [#tpu.dimension_semantics<parallel>], iteration_bounds = array<i64: 2>, scalar_prefetch = 0 : i64, scratch_operands = 0 : i64, tpu.core_type = #tpu.core_type<tc>, window_params = [{transform_indices = @transform_0, window_bounds = array<i64: 8, 768>}, {pipeline_mode = #tpu.pipeline_mode<synchronous>, transform_indices = @transform_1, window_bounds = array<i64: 1, 768>}, {pipeline_mode = #tpu.pipeline_mode<synchronous>, transform_indices = @transform_2, window_bounds = array<i64: 1, 768>}, {transform_indices = @transform_3, window_bounds = array<i64: 8, 768>}]} {
    %c0 = arith.constant 0 : index
    %c0_0 = arith.constant 0 : index
    %0 = vector.load %arg1[%c0, %c0_0] : memref<8x768xf32, #tpu.memory_space<vmem>>, vector<8x768xf32>
    %cst = arith.constant dense<0.000000e+00> : vector<8xf32>
    %1 = vector.multi_reduction <add>, %0, %cst [1] : vector<8x768xf32> to vector<8xf32>
    %2 = vector.shape_cast %1 : vector<8xf32> to vector<8x1xf32>
    %cst_1 = arith.constant 0.00130208337 : f32
    %3 = vector.broadcast %cst_1 : f32 to vector<8x1xf32>
    %4 = arith.mulf %2, %3 : vector<8x1xf32>
    %5 = vector.broadcast %4 : vector<8x1xf32> to vector<8x768xf32>
    %6 = arith.subf %0, %5 : vector<8x768xf32>
    %7 = arith.mulf %6, %6 : vector<8x768xf32>
    %cst_2 = arith.constant dense<0.000000e+00> : vector<8xf32>
    %8 = vector.multi_reduction <add>, %7, %cst_2 [1] : vector<8x768xf32> to vector<8xf32>
    %9 = vector.shape_cast %8 : vector<8xf32> to vector<8x1xf32>
    %cst_3 = arith.constant 0.00130208337 : f32
    %10 = vector.broadcast %cst_3 : f32 to vector<8x1xf32>
    %11 = arith.mulf %9, %10 : vector<8x1xf32>
    %cst_4 = arith.constant 9.99999974E-6 : f32
    %12 = vector.broadcast %cst_4 : f32 to vector<8x1xf32>
    %13 = arith.addf %11, %12 : vector<8x1xf32>
    %14 = math.rsqrt %13 : vector<8x1xf32>
    %15 = vector.broadcast %14 : vector<8x1xf32> to vector<8x768xf32>
    %16 = arith.mulf %6, %15 : vector<8x768xf32>
    %c0_5 = arith.constant 0 : index
    %c0_6 = arith.constant 0 : index
    %17 = vector.load %arg2[%c0_5, %c0_6] : memref<1x768xf32, #tpu.memory_space<vmem>>, vector<1x768xf32>
    %18 = vector.broadcast %17 : vector<1x768xf32> to vector<8x768xf32>
    %19 = arith.mulf %16, %18 : vector<8x768xf32>
    %c0_7 = arith.constant 0 : index
    %c0_8 = arith.constant 0 : index
    %20 = vector.load %arg3[%c0_7, %c0_8] : memref<1x768xf32, #tpu.memory_space<vmem>>, vector<1x768xf32>
    %21 = vector.broadcast %20 : vector<1x768xf32> to vector<8x768xf32>
    %22 = arith.addf %19, %21 : vector<8x768xf32>
    %c0_9 = arith.constant 0 : index
    %c0_10 = arith.constant 0 : index
    %23 = vector.load %arg4[%c0_9, %c0_10] : memref<8x768xf32, #tpu.memory_space<vmem>>, vector<8x768xf32>
    tpu.vector_store %arg4[%c0_9, %c0_10], %22 {strides = array<i32>} : memref<8x768xf32, #tpu.memory_space<vmem>>, vector<8x768xf32>,
    return
  }
  func.func @transform_0(%arg0: i32) -> (i32, i32) {
    %c0_i32 = arith.constant 0 : i32
    %c0_i32_0 = arith.constant 0 : i32
    return %arg0, %c0_i32 : i32, i32
  }
  func.func @transform_1(%arg0: i32) -> (i32, i32) {
    %c0_i32 = arith.constant 0 : i32
    %c0_i32_0 = arith.constant 0 : i32
    %c0_i32_1 = arith.constant 0 : i32
    return %c0_i32, %c0_i32_0 : i32, i32
  }
  func.func @transform_2(%arg0: i32) -> (i32, i32) {
    %c0_i32 = arith.constant 0 : i32
    %c0_i32_0 = arith.constant 0 : i32
    %c0_i32_1 = arith.constant 0 : i32
    return %c0_i32, %c0_i32_0 : i32, i32
  }
  func.func @transform_3(%arg0: i32) -> (i32, i32) {
    %c0_i32 = arith.constant 0 : i32
    %c0_i32_0 = arith.constant 0 : i32
    return %arg0, %c0_i32 : i32, i32
  }
}

</mosaic_0001>

<llo_original>
// kernel: tpu_custom_call.1
$region0: #{tpu_custom_call.1}
  #allocation0 [shape = 'u32[]', space=smem, size = 0x4, offset = 0x4, fixed_abs, tag = 'smem constant byte address 0x4 - core index']
  #allocation1 [shape = 'u32[144,128]{1,0:T(1,128)}', space=vmem, size = 0x12000, scoped, tag = 'internal scratch']
  %s0 = inlined_call_operand.hbm [shape: f32[16,768], index: 0, kind: input, shape index: {}]
  %s1 = inlined_call_operand.hbm [shape: f32[1,768], index: 1, kind: input, shape index: {}]
  %s2 = inlined_call_operand.vmem [shape: f32[1,768], index: 2, kind: input, shape index: {}]
  %s3 = inlined_call_operand.hbm [shape: f32[16,768], index: 3, kind: output, shape index: {}]
  %s4 = sld [smem:[#allocation0]]
  $region53: #{tpu_custom_call.1} parent=0
    _
  %s6 = ssub.s32 1, %s4
  %s7 = scalar_select 0, %s6, %s4
  $region1: #{tpu_custom_call.1} parent=0
    #allocation2 [shape = 'u8[49152]{0}', space=vmem, size = 0xc000, scoped, tag = 'input window, operand 0']
    #allocation3 [shape = 's32[2]{0}', space=sflag, size = 0x8, scoped, tag = 'scoped memory for tpu_custom_call.1']
    #allocation4 [shape = 's32[2]{0}', space=sflag, size = 0x8, scoped, tag = 'scoped memory for tpu_custom_call.1']
    #allocation5 [shape = 'u8[3072]{0}', space=vmem, size = 0xc00, scoped, tag = 'input window, operand 1, single buffered']
    #allocation6 [shape = 's32[1]{0}', space=sflag, size = 0x4, scoped, tag = 'scoped memory for tpu_custom_call.1']
    #allocation7 [shape = 'u8[49152]{0}', space=vmem, size = 0xc000, scoped, tag = 'output window, operand 0']
    %8 = vsyncpa [#allocation3], 0
    %s9 = scalar_lea.sflag [#allocation3], 1
    %10 = vsyncpa %s9, 0
    %11 = vsyncpa [#allocation6], 0
    %12 = vsyncpa [#allocation4], 0
    %s13 = scalar_lea.sflag [#allocation4], 1
    %14 = vsyncpa %s13, 0
    loop: start=0, step=1, limit=4
    $region2: #{tpu_custom_call.1} parent=1 // loop_pre_header
      _
    $region3: #{tpu_custom_call.1} parent=1 // loop_header
      %s16 = sphi 0, %s20
      %p17 = scmp.ge.s32.totalorder %s16, 4
      %s26 = sphi 0, %s28
      %s29 = sphi 0, %s26
      %s30 = sphi 0, %s29
      %s46 = sphi 0, %s30
      %s50 = sphi 0, %s50
      %s52 = sphi 0, %s50
      %s53 = sphi 0, %s52
      %s67 = sphi 0, %s53
      %s71 = sphi 0, %s71
      %s73 = sphi 0, %s71
      %s74 = sphi 0, %s73
      %s88 = sphi 0, %s74
      %s94 = sphi 0, %s96
      %s97 = sphi 0, %s94
      %s98 = sphi 0, %s97
      %s114 = sphi 0, %s98
    $region4: #{tpu_custom_call.1} parent=1 // loop_header_branch
      %19 = sbr.rel (%p17) target = $region8
    $region5: #{tpu_custom_call.1} parent=1 // loop_body
      %s21 = ssub.s32 %s16, 1
      %s22 = ssub.s32 %s16, 2
      %s23 = sadd.s32 %s16, 1
      %s24 = ssub.s32 %s16, %s23
      %p25 = scmp.eq.s32.totalorder %s24, 0
      %s27 = sadd.s32 %s26, 1
      %s28 = scalar_select %p25, %s26, %s27
      %p31 = pneg %p25
      %p32 = scmp.eq.s32.totalorder %s16, 1
      %p33 = por %p31, %p32
      %p34 = scmp.ne.s32.totalorder %s26, %s29
      %p35 = scmp.eq.s32.totalorder %s16, 0
      %p36 = por %p34, %p35
      %p37 = scmp.ne.s32.totalorder %s26, %s29
      %p38 = scmp.eq.s32.totalorder %s21, 1
      %p39 = por %p37, %p38
      %p40 = scmp.ne.s32.totalorder %s29, %s30
      %p41 = scmp.eq.s32.totalorder %s21, 0
      %p42 = por %p40, %p41
      %p43 = scmp.ne.s32.totalorder %s29, %s30
      %p44 = scmp.eq.s32.totalorder %s22, 1
      %p45 = por %p43, %p44
      %p47 = scmp.ne.s32.totalorder %s30, %s46
      %p48 = scmp.eq.s32.totalorder %s22, 0
      %p49 = por %p47, %p48
      %s51 = sadd.s32 %s50, 1
      %p54 = scmp.eq.s32.totalorder %s16, 1
      %p55 = scmp.ne.s32.totalorder %s50, %s52
      %p56 = scmp.eq.s32.totalorder %s16, 0
      %p57 = por %p55, %p56
      %p58 = scmp.ne.s32.totalorder %s50, %s52
      %p59 = scmp.eq.s32.totalorder %s21, 1
      %p60 = por %p58, %p59
      %p61 = scmp.ne.s32.totalorder %s52, %s53
      %p62 = scmp.eq.s32.totalorder %s21, 0
      %p63 = por %p61, %p62
      %p64 = scmp.ne.s32.totalorder %s52, %s53
      %p65 = scmp.eq.s32.totalorder %s22, 1
      %p66 = por %p64, %p65
      %p68 = scmp.ne.s32.totalorder %s53, %s67
      %p69 = scmp.eq.s32.totalorder %s22, 0
      %p70 = por %p68, %p69
      %s72 = sadd.s32 %s71, 1
      %p75 = scmp.eq.s32.totalorder %s16, 1
      %p76 = scmp.ne.s32.totalorder %s71, %s73
      %p77 = scmp.eq.s32.totalorder %s16, 0
      %p78 = por %p76, %p77
      %p79 = scmp.ne.s32.totalorder %s71, %s73
      %p80 = scmp.eq.s32.totalorder %s21, 1
      %p81 = por %p79, %p80
      %p82 = scmp.ne.s32.totalorder %s73, %s74
      %p83 = scmp.eq.s32.totalorder %s21, 0
      %p84 = por %p82, %p83
      %p85 = scmp.ne.s32.totalorder %s73, %s74
      %p86 = scmp.eq.s32.totalorder %s22, 1
      %p87 = por %p85, %p86
      %p89 = scmp.ne.s32.totalorder %s74, %s88
      %p90 = scmp.eq.s32.totalorder %s22, 0
      %p91 = por %p89, %p90
      %s92 = ssub.s32 %s16, %s23
      %p93 = scmp.eq.s32.totalorder %s92, 0
      %s95 = sadd.s32 %s94, 1
      %s96 = scalar_select %p93, %s94, %s95
      %p99 = pneg %p93
      %p100 = scmp.eq.s32.totalorder %s16, 1
      %p101 = por %p99, %p100
      %p102 = scmp.ne.s32.totalorder %s94, %s97
      %p103 = scmp.eq.s32.totalorder %s16, 0
      %p104 = por %p102, %p103
      %p105 = scmp.ne.s32.totalorder %s94, %s97
      %p106 = scmp.eq.s32.totalorder %s21, 1
      %p107 = por %p105, %p106
      %p108 = scmp.ne.s32.totalorder %s97, %s98
      %p109 = scmp.eq.s32.totalorder %s21, 0
      %p110 = por %p108, %p109
      %p111 = scmp.ne.s32.totalorder %s97, %s98
      %p112 = scmp.eq.s32.totalorder %s22, 1
      %p113 = por %p111, %p112
      %p115 = scmp.ne.s32.totalorder %s98, %s114
      %p116 = scmp.eq.s32.totalorder %s22, 0
      %p117 = por %p115, %p116
      %p118 = scmp.le.s32.totalorder 1, %s16
      %p119 = scmp.lt.s32.totalorder %s16, 3
      %p120 = pnand %p118, %p119
      %p121 = pneg %p120
      // Predicated region
      $region9: #{tpu_custom_call.1} parent=5 // pred_check
        _
      $region10: #{tpu_custom_call.1} parent=5 // pred_check_branch
        %123 = sbr.rel (%p120) target = $region12
      $region11: #{tpu_custom_call.1} parent=5 // pred_region
        %s124 = ssub.s32 %s16, 1
        // Predicated region
        $region13: #{tpu_custom_call.1} parent=11 // pred_check
          %p125 = pneg %p63
        $region14: #{tpu_custom_call.1} parent=11 // pred_check_branch
          %127 = sbr.rel (%p125) target = $region16
        $region15: #{tpu_custom_call.1} parent=11 // pred_region
          %s129 = ssub.s32 96, 96
          %130 = vsyncadd [#allocation6], %s129
          %s132 = sshll.u32 [#allocation5], 4
          %s133 = int_to_ptr.vmem [resolvable:$true] %s132
          %135 = dma.hbm_to_vmem [thread:$0]  %s1, 96, %s133, [#allocation6]
        $region16: #{tpu_custom_call.1} parent=11 // pred_fallthru
          _
        // Predicated region
        $region17: #{tpu_custom_call.1} parent=11 // pred_check
          %p136 = pneg %p84
        $region18: #{tpu_custom_call.1} parent=11 // pred_check_branch
          %138 = sbr.rel (%p136) target = $region20
        $region19: #{tpu_custom_call.1} parent=11 // pred_region
          _
        $region20: #{tpu_custom_call.1} parent=11 // pred_fallthru
          _
      $region12: #{tpu_custom_call.1} parent=5 // pred_fallthru
        _
      %p139 = scmp.lt.s32.totalorder %s16, 2
      // Predicated region
      $region21: #{tpu_custom_call.1} parent=5 // pred_check
        %p140 = pneg %p139
      $region22: #{tpu_custom_call.1} parent=5 // pred_check_branch
        %142 = sbr.rel (%p140) target = $region24
      $region23: #{tpu_custom_call.1} parent=5 // pred_region
        // Predicated region
        $region25: #{tpu_custom_call.1} parent=23 // pred_check
          %p143 = pneg %p36
        $region26: #{tpu_custom_call.1} parent=23 // pred_check_branch
          %145 = sbr.rel (%p143) target = $region28
        $region27: #{tpu_custom_call.1} parent=23 // pred_region
          %s146 = sand.u32 %s26, 1
          %s147 = scalar_lea.sflag [#allocation3], %s146
          %s148 = sand.u32 %s26, 1
          %s149 = smul.addr %s148, 48
          %s150 = scalar_lea.vmem [#allocation2], %s149
          %s152 = ssub.s32 768, 768
          %153 = vsyncadd %s147, %s152
          %s154 = smul.addr %s16, 6
          %s155 = smul.addr %s154, 128
          %s156 = scalar_lea.hbm %s0, %s155
          %s158 = sshll.u32 %s150, 4
          %s159 = int_to_ptr.vmem [resolvable:$true] %s158
          %161 = dma.hbm_to_vmem [thread:$0]  %s156, 768, %s159, %s147
        $region28: #{tpu_custom_call.1} parent=23 // pred_fallthru
          _
      $region24: #{tpu_custom_call.1} parent=5 // pred_fallthru
        _
      %p162 = scmp.le.s32.totalorder 1, %s16
      %p163 = scmp.lt.s32.totalorder %s16, 3
      %p164 = pnand %p162, %p163
      %p165 = pneg %p164
      // Predicated region
      $region29: #{tpu_custom_call.1} parent=5 // pred_check
        _
      $region30: #{tpu_custom_call.1} parent=5 // pred_check_branch
        %167 = sbr.rel (%p164) target = $region32
      $region31: #{tpu_custom_call.1} parent=5 // pred_region
        %s168 = ssub.s32 %s16, 1
        %s169 = sand.u32 %s29, 1
        %s170 = scalar_lea.sflag [#allocation3], %s169
        %s171 = sand.u32 %s29, 1
        %s172 = smul.addr %s171, 48
        %s173 = scalar_lea.vmem [#allocation2], %s172
        // Predicated region
        $region33: #{tpu_custom_call.1} parent=31 // pred_check
          %p174 = pneg %p42
        $region34: #{tpu_custom_call.1} parent=31 // pred_check_branch
          %176 = sbr.rel (%p174) target = $region36
        $region35: #{tpu_custom_call.1} parent=31 // pred_region
          %177 = dma.done %s170, 768
        $region36: #{tpu_custom_call.1} parent=31 // pred_fallthru
          _
        // Predicated region
        $region37: #{tpu_custom_call.1} parent=31 // pred_check
          %p178 = pneg %p63
        $region38: #{tpu_custom_call.1} parent=31 // pred_check_branch
          %180 = sbr.rel (%p178) target = $region40
        $region39: #{tpu_custom_call.1} parent=31 // pred_region
          %181 = dma.done [#allocation6], 96
        $region40: #{tpu_custom_call.1} parent=31 // pred_fallthru
          _
        %s182 = sand.u32 %s29, 1
        %s183 = scalar_lea.sflag [#allocation3], %s182
        %s184 = sand.u32 %s29, 1
        %s185 = smul.addr %s184, 48
        %s186 = scalar_lea.vmem [#allocation2], %s185
        %p187 = pneg %p42
        %p188 = pneg %p39
        %p189 = pneg %p63
        %p190 = pneg %p60
        %p191 = pneg %p84
        %p192 = pneg %p81
        %p193 = pneg %p110
        %p194 = pneg %p107
        %s195 = sand.u32 %s97, 1
        %s196 = scalar_lea.sflag [#allocation4], %s195
        %s197 = sand.u32 %s97, 1
        %s198 = smul.addr %s197, 48
        %s199 = scalar_lea.vmem [#allocation7], %s198
        %v200 = vld [vmem:[%s173] sm:$0xff]
        %v201 = vld [vmem:[%s173 + $0x8] sm:$0xff]
        %v202 = vld [vmem:[%s173 + $0x10] sm:$0xff]
        %v203 = vld [vmem:[%s173 + $0x18] sm:$0xff]
        %v204 = vld [vmem:[%s173 + $0x20] sm:$0xff]
        %v205 = vld [vmem:[%s173 + $0x28] sm:$0xff]
        %v206 = vadd.f32 %v200, %v201
        %v207 = vadd.f32 %v206, %v202
        %v208 = vadd.f32 %v207, %v203
        %v209 = vadd.f32 %v208, %v204
        %v210 = vadd.f32 %v209, %v205
        %211 = vadd.xlane.f32.xlu0 %v210
        %v212 = vpop.xlane.xlu0 %211
        %v213 = vmul.f32 %v212, 0.0013020834
        %v214 = vsub.f32 %v200, %v213
        %v215 = vsub.f32 %v201, %v213
        %v216 = vsub.f32 %v202, %v213
        %v217 = vsub.f32 %v203, %v213
        %v218 = vsub.f32 %v204, %v213
        %v219 = vsub.f32 %v205, %v213
        %v220 = vmul.f32 %v214, %v214
        %v221 = vmul.f32 %v215, %v215
        %v222 = vmul.f32 %v216, %v216
        %v223 = vmul.f32 %v217, %v217
        %v224 = vmul.f32 %v218, %v218
        %v225 = vmul.f32 %v219, %v219
        %v226 = vadd.f32 %v220, %v221
        %v227 = vadd.f32 %v226, %v222
        %v228 = vadd.f32 %v227, %v223
        %v229 = vadd.f32 %v228, %v224
        %v230 = vadd.f32 %v229, %v225
        %231 = vadd.xlane.f32.xlu0 %v230
        %v232 = vpop.xlane.xlu0 %231
        %v233 = vmul.f32 %v232, 0.0013020834
        %v234 = vadd.f32 %v233, 1e-05
        %v235 = vrsqrt.pop %v234
        %v236 = vmul.f32 %v214, %v235
        %v237 = vmul.f32 %v215, %v235
        %v238 = vmul.f32 %v216, %v235
        %v239 = vmul.f32 %v217, %v235
        %v240 = vmul.f32 %v218, %v235
        %v241 = vmul.f32 %v219, %v235
        %v242 = vld [vmem:[#allocation5] sm:$0x3f]
        %v244 = vlaneseq
        %v245 = vshrl.u32 %v244, 7
        %v246 = vsub.s32 0, %v245
        %v247 = vrot.slane %v242, %v246
        %v248 = vlaneseq
        %v249 = vshrl.u32 %v248, 7
        %v250 = vsub.s32 1, %v249
        %v251 = vrot.slane %v242, %v250
        %v252 = vlaneseq
        %v253 = vshrl.u32 %v252, 7
        %v254 = vsub.s32 2, %v253
        %v255 = vrot.slane %v242, %v254
        %v256 = vlaneseq
        %v257 = vshrl.u32 %v256, 7
        %v258 = vsub.s32 3, %v257
        %v259 = vrot.slane %v242, %v258
        %v260 = vlaneseq
        %v261 = vshrl.u32 %v260, 7
        %v262 = vsub.s32 4, %v261
        %v263 = vrot.slane %v242, %v262
        %v264 = vlaneseq
        %v265 = vshrl.u32 %v264, 7
        %v266 = vsub.s32 5, %v265
        %v267 = vrot.slane %v242, %v266
        %v274 = vmul.f32 %v236, %v247
        %v275 = vmul.f32 %v237, %v251
        %v276 = vmul.f32 %v238, %v255
        %v277 = vmul.f32 %v239, %v259
        %v278 = vmul.f32 %v240, %v263
        %v279 = vmul.f32 %v241, %v267
        %v280 = vld [vmem:[%s2] sm:$0x3f]
        %v282 = vlaneseq
        %v283 = vshrl.u32 %v282, 7
        %v284 = vsub.s32 0, %v283
        %v285 = vrot.slane %v280, %v284
        %v286 = vlaneseq
        %v287 = vshrl.u32 %v286, 7
        %v288 = vsub.s32 1, %v287
        %v289 = vrot.slane %v280, %v288
        %v290 = vlaneseq
        %v291 = vshrl.u32 %v290, 7
        %v292 = vsub.s32 2, %v291
        %v293 = vrot.slane %v280, %v292
        %v294 = vlaneseq
        %v295 = vshrl.u32 %v294, 7
        %v296 = vsub.s32 3, %v295
        %v297 = vrot.slane %v280, %v296
        %v298 = vlaneseq
        %v299 = vshrl.u32 %v298, 7
        %v300 = vsub.s32 4, %v299
        %v301 = vrot.slane %v280, %v300
        %v302 = vlaneseq
        %v303 = vshrl.u32 %v302, 7
        %v304 = vsub.s32 5, %v303
        %v305 = vrot.slane %v280, %v304
        %v312 = vadd.f32 %v274, %v285
        %v313 = vadd.f32 %v275, %v289
        %v314 = vadd.f32 %v276, %v293
        %v315 = vadd.f32 %v277, %v297
        %v316 = vadd.f32 %v278, %v301
        %v317 = vadd.f32 %v279, %v305
        %318 = vst [vmem:[%s199] sm:$0xff] %v312
        %319 = vst [vmem:[%s199 + $0x8] sm:$0xff] %v313
        %320 = vst [vmem:[%s199 + $0x10] sm:$0xff] %v314
        %321 = vst [vmem:[%s199 + $0x18] sm:$0xff] %v315
        %322 = vst [vmem:[%s199 + $0x20] sm:$0xff] %v316
        %323 = vst [vmem:[%s199 + $0x28] sm:$0xff] %v317
        %s324 = sand.u32 %s97, 1
        %s325 = scalar_lea.sflag [#allocation4], %s324
        %s326 = sand.u32 %s97, 1
        %s327 = smul.addr %s326, 48
        %s328 = scalar_lea.vmem [#allocation7], %s327
        // Predicated region
        $region41: #{tpu_custom_call.1} parent=31 // pred_check
          %p329 = pneg %p107
        $region42: #{tpu_custom_call.1} parent=31 // pred_check_branch
          %331 = sbr.rel (%p329) target = $region44
        $region43: #{tpu_custom_call.1} parent=31 // pred_region
          %s333 = ssub.s32 768, 768
          %334 = vsyncadd %s325, %s333
          %s335 = smul.addr %s21, 6
          %s336 = smul.addr %s335, 128
          %s337 = scalar_lea.hbm %s3, %s336
          %s339 = sshll.u32 %s328, 4
          %s340 = int_to_ptr.vmem [resolvable:$true] %s339
          %342 = dma.vmem_to_hbm [thread:$0]  %s340, 768, %s337, %s325
        $region44: #{tpu_custom_call.1} parent=31 // pred_fallthru
          _
      $region32: #{tpu_custom_call.1} parent=5 // pred_fallthru
        _
      %p343 = scmp.le.s32.totalorder 2, %s16
      // Predicated region
      $region45: #{tpu_custom_call.1} parent=5 // pred_check
        %p344 = pneg %p343
      $region46: #{tpu_custom_call.1} parent=5 // pred_check_branch
        %346 = sbr.rel (%p344) target = $region48
      $region47: #{tpu_custom_call.1} parent=5 // pred_region
        %s347 = ssub.s32 %s16, 2
        // Predicated region
        $region49: #{tpu_custom_call.1} parent=47 // pred_check
          %p348 = pneg %p113
        $region50: #{tpu_custom_call.1} parent=47 // pred_check_branch
          %350 = sbr.rel (%p348) target = $region52
        $region51: #{tpu_custom_call.1} parent=47 // pred_region
          %s351 = sand.u32 %s98, 1
          %s352 = scalar_lea.sflag [#allocation4], %s351
          %s353 = sand.u32 %s98, 1
          %s354 = smul.addr %s353, 48
          %s355 = scalar_lea.vmem [#allocation7], %s354
          %356 = dma.done %s352, 768
        $region52: #{tpu_custom_call.1} parent=47 // pred_fallthru
          _
      $region48: #{tpu_custom_call.1} parent=5 // pred_fallthru
        _
    $region6: #{tpu_custom_call.1} parent=1 // loop_footer
      %s20 = sadd.s32 1, %s16
    $region7: #{tpu_custom_call.1} parent=1 // loop_footer_branch
      %15 = sbr.rel target = $region3
    $region8: #{tpu_custom_call.1} parent=1 // loop_exit
      _
    %357 = vsyncpa [#allocation3], 1
    %s358 = scalar_lea.sflag [#allocation3], 1
    %359 = vsyncpa %s358, 1
    %360 = vsyncpa [#allocation6], 1
    %361 = vsyncpa [#allocation4], 1
    %s362 = scalar_lea.sflag [#allocation4], 1
    %363 = vsyncpa %s362, 1

</llo_original>
